<compile_context>
chip_gen: v6e
topology: v6e:2x2x1
jax: 0.10.0
libtpu: 0.0.40
codegen_flags: <defaults>
</compile_context>

<pallas_src>
import math

import jax
import jax.numpy as jnp
from jax.experimental import pallas as pl
from jax.experimental.pallas import tpu as pltpu

BCE_WEIGHT = 0.5
DICE_WEIGHT = 0.5
POS_WEIGHT = 100.0
SMOOTH = 1.0
# sigmoid / softplus of this underflow to 0 in f32, so padded positions add ~0.
_PAD_LOGIT = -100.0


def _compound_loss_kernel(logits_ref, targets_ref, bce_ref, pt_ref, s_ref):
    """One (B, ROWS, LANES) tile: element-wise BCE + sigmoid partial sums."""
    inner = pl.program_id(1)

    @pl.when(inner == 0)
    def _init():
        bce_ref[...] = jnp.zeros_like(bce_ref)
        pt_ref[...] = jnp.zeros_like(pt_ref)
        s_ref[...] = jnp.zeros_like(s_ref)

    x = logits_ref[...].astype(jnp.float32)   # (B, ROWS, LANES)
    t = targets_ref[...].astype(jnp.float32)

    # One exp per element feeds both the stable softplus and the sigmoid.
    e = jnp.exp(-jnp.abs(x))
    sp = jnp.maximum(x, 0.0) + jnp.log1p(e)           # softplus(x), stable
    # BCEWithLogits(pos_weight): pw*t*(-log sig) + (1-t)*(-log(1-sig))
    #   -log sigmoid(x) = sp - x ; -log(1 - sigmoid(x)) = sp
    bce_elem = (POS_WEIGHT * t) * (sp - x) + (1.0 - t) * sp
    # sigmoid(x) from the shared exp.  Exact divide kept for accuracy;
    # pl.reciprocal(1+e, approx=True) would be cheaper but looser (~1e-4 rel).
    inv = 1.0 / (1.0 + e)
    probs = jnp.where(x >= 0.0, inv, e * inv)

    # Pure element-wise (VPU) accumulation; cross-lane reduces happen once,
    # outside the kernel, on these tile-shaped partials.
    bce_ref[...] += bce_elem
    pt_ref[...] += probs * t
    s_ref[...] += probs + t


def compound_loss(logits, targets, *, lanes=512, rows=8, n_par=2):
    """logits, targets: (B, C, H, W) (any float/int dtype). Returns f32 scalar."""
    B = logits.shape[0]
    n_true = math.prod(logits.shape[1:])
    x = logits.reshape(B, n_true)
    t = targets.reshape(B, n_true)

    # Pad N up to a multiple of n_par * rows * lanes with "inert" elements.
    chunk = n_par * rows * lanes
    n_pad = pl.cdiv(n_true, chunk) * chunk
    if n_pad != n_true:
        pad = n_pad - n_true
        x = jnp.pad(x, ((0, 0), (0, pad)), constant_values=_PAD_LOGIT)
        t = jnp.pad(t, ((0, 0), (0, pad)), constant_values=0)

    nr = n_pad // lanes                 # total row count
    t_inner = nr // (rows * n_par)      # tiles handled by each parallel index
    x = x.reshape(B, nr, lanes)
    t = t.reshape(B, nr, lanes)

    in_block = (B, rows, lanes)
    out_block = (None, B, rows, lanes)  # leading dim squeezed in the kernel
    out_sds = jax.ShapeDtypeStruct((n_par, B, rows, lanes), jnp.float32)

    in_bytes = x.size * x.dtype.itemsize + t.size * t.dtype.itemsize
    out_bytes = 3 * n_par * B * rows * lanes * 4

    bce_part, pt_part, s_part = pl.pallas_call(
        _compound_loss_kernel,
        out_shape=(out_sds, out_sds, out_sds),
        grid_spec=pl.GridSpec(
            grid=(n_par, t_inner),
            in_specs=[
                pl.BlockSpec(in_block, lambda c, i: (0, c * t_inner + i, 0)),
                pl.BlockSpec(in_block, lambda c, i: (0, c * t_inner + i, 0)),
            ],
            out_specs=(
                pl.BlockSpec(out_block, lambda c, i: (c, 0, 0, 0)),
                pl.BlockSpec(out_block, lambda c, i: (c, 0, 0, 0)),
                pl.BlockSpec(out_block, lambda c, i: (c, 0, 0, 0)),
            ),
        ),
        compiler_params=pltpu.CompilerParams(
            dimension_semantics=("parallel", "arbitrary")),
        cost_estimate=pl.CostEstimate(
            flops=12 * B * n_pad,
            transcendentals=2 * B * n_pad,
            bytes_accessed=in_bytes + out_bytes),
    )(x, t)

    # Final (tiny, O(tile)) reductions + scalar math: combine per-core partials.
    bce_sum = jnp.sum(bce_part)
    pt = jnp.sum(pt_part, axis=(0, 2, 3))          # (B,)  sum(p * t)
    s = jnp.sum(s_part, axis=(0, 2, 3))            # (B,)  sum(p) + sum(t)

    bce_loss = bce_sum / (B * n_true)              # mean over TRUE element count
    dice_score = (2.0 * pt + SMOOTH) / (s + SMOOTH)
    dice_loss = jnp.mean(1.0 - dice_score)
    return BCE_WEIGHT * bce_loss + DICE_WEIGHT * dice_loss


def _reference(logits, targets):
    """Pure-JAX reference mirroring the PyTorch module."""
    B = logits.shape[0]
    x = logits.reshape(B, -1).astype(jnp.float32)
    t = targets.reshape(B, -1).astype(jnp.float32)
    sp = jnp.maximum(x, 0.0) + jnp.log1p(jnp.exp(-jnp.abs(x)))
    bce = jnp.mean(POS_WEIGHT * t * (sp - x) + (1.0 - t) * sp)
    p = jax.nn.sigmoid(x)
    inter = jnp.sum(p * t, axis=1)
    dice = (2.0 * inter + SMOOTH) / (jnp.sum(p, axis=1) + jnp.sum(t, axis=1) + SMOOTH)
    dice_loss = jnp.mean(1.0 - dice)
    return BCE_WEIGHT * bce + DICE_WEIGHT * dice_loss


if __name__ == "__main__":
    key = jax.random.PRNGKey(0)
    k1, k2, k3 = jax.random.split(key, 3)

    def make(shape, dtype, k):
        ka, kb = jax.random.split(k)
        lg = (jax.random.normal(ka, shape, dtype=jnp.float32) * 2.0).astype(dtype)
        tg = (jax.random.uniform(kb, shape) > 0.9).astype(dtype)
        return lg, tg

    # 1) Required small shape (B=2, C=4, 16x16), f32, grid (2, 1).
    lg, tg = make((2, 4, 16, 16), jnp.float32, k1)
    out = compound_loss(lg, tg, lanes=128, rows=8, n_par=2)
    jax.block_until_ready(out)
    ref = _reference(lg, tg)
    assert jnp.allclose(out, ref, rtol=2e-5, atol=1e-5), (out, ref)

    # 2) Ragged N (exercises padding) + multi-tile inner accumulation, grid (2, 3).
    lg, tg = make((2, 3, 33, 47), jnp.float32, k2)
    out = compound_loss(lg, tg, lanes=128, rows=8, n_par=2)
    jax.block_until_ready(out)
    ref = _reference(lg, tg)
    assert jnp.allclose(out, ref, rtol=2e-5, atol=1e-5), (out, ref)

    # 3) bf16 inputs fed straight to the kernel (no wrapper upcast).
    lg, tg = make((2, 4, 16, 16), jnp.bfloat16, k3)
    out = compound_loss(lg, tg, lanes=128, rows=8, n_par=2)
    jax.block_until_ready(out)
    ref = _reference(lg, tg)
    assert jnp.allclose(out, ref, rtol=1e-4, atol=1e-4), (out, ref)

    print("KERNEL_OK")
</pallas_src>

<mosaic_0001>
module attributes {stable_mosaic.version = 11 : i64} {
  func.func @_compound_loss_kernel(%arg0: i32, %arg1: i32, %arg2: memref<2x8x128xf32, #tpu.memory_space<vmem>>, %arg3: memref<2x8x128xf32, #tpu.memory_space<vmem>>, %arg4: memref<1x2x8x128xf32, #tpu.memory_space<vmem>>, %arg5: memref<1x2x8x128xf32, #tpu.memory_space<vmem>>, %arg6: memref<1x2x8x128xf32, #tpu.memory_space<vmem>>) attributes {dimension_semantics = [#tpu.dimension_semantics<parallel>, #tpu.dimension_semantics<arbitrary>], iteration_bounds = array<i64: 2, 1>, scalar_prefetch = 0 : i64, scratch_operands = 0 : i64, tpu.core_type = #tpu.core_type<tc>, window_params = [{transform_indices = @transform_0, window_bounds = array<i64: 2, 8, 128>}, {transform_indices = @transform_1, window_bounds = array<i64: 2, 8, 128>}, {transform_indices = @transform_2, window_bounds = array<i64: 1, 2, 8, 128>}, {transform_indices = @transform_3, window_bounds = array<i64: 1, 2, 8, 128>}, {transform_indices = @transform_4, window_bounds = array<i64: 1, 2, 8, 128>}]} {
    %c0_i32 = arith.constant 0 : i32
    %0 = arith.cmpi eq, %arg1, %c0_i32 : i32
    %1 = arith.extui %0 : i1 to i32
    %c0_i32_0 = arith.constant 0 : i32
    %2 = arith.cmpi ne, %1, %c0_i32_0 : i32
    scf.if %2 {
      %cst_36 = arith.constant 0.000000e+00 : f32
      %49 = vector.broadcast %cst_36 : f32 to vector<2x8x128xf32>
      %c0_37 = arith.constant 0 : index
      %c0_38 = arith.constant 0 : index
      %c0_39 = arith.constant 0 : index
      %c0_40 = arith.constant 0 : index
      %50 = vector.load %arg4[%c0_37, %c0_38, %c0_39, %c0_40] : memref<1x2x8x128xf32, #tpu.memory_space<vmem>>, vector<1x2x8x128xf32>
      %51 = vector.shape_cast %50 : vector<1x2x8x128xf32> to vector<2x8x128xf32>
      %52 = vector.shape_cast %49 : vector<2x8x128xf32> to vector<1x2x8x128xf32>
      tpu.vector_store %arg4[%c0_37, %c0_38, %c0_39, %c0_40], %52 {strides = array<i32>} : memref<1x2x8x128xf32, #tpu.memory_space<vmem>>, vector<1x2x8x128xf32>,
      %cst_41 = arith.constant 0.000000e+00 : f32
      %53 = vector.broadcast %cst_41 : f32 to vector<2x8x128xf32>
      %c0_42 = arith.constant 0 : index
      %c0_43 = arith.constant 0 : index
      %c0_44 = arith.constant 0 : index
      %c0_45 = arith.constant 0 : index
      %54 = vector.load %arg5[%c0_42, %c0_43, %c0_44, %c0_45] : memref<1x2x8x128xf32, #tpu.memory_space<vmem>>, vector<1x2x8x128xf32>
      %55 = vector.shape_cast %54 : vector<1x2x8x128xf32> to vector<2x8x128xf32>
      %56 = vector.shape_cast %53 : vector<2x8x128xf32> to vector<1x2x8x128xf32>
      tpu.vector_store %arg5[%c0_42, %c0_43, %c0_44, %c0_45], %56 {strides = array<i32>} : memref<1x2x8x128xf32, #tpu.memory_space<vmem>>, vector<1x2x8x128xf32>,
      %cst_46 = arith.constant 0.000000e+00 : f32
      %57 = vector.broadcast %cst_46 : f32 to vector<2x8x128xf32>
      %c0_47 = arith.constant 0 : index
      %c0_48 = arith.constant 0 : index
      %c0_49 = arith.constant 0 : index
      %c0_50 = arith.constant 0 : index
      %58 = vector.load %arg6[%c0_47, %c0_48, %c0_49, %c0_50] : memref<1x2x8x128xf32, #tpu.memory_space<vmem>>, vector<1x2x8x128xf32>
      %59 = vector.shape_cast %58 : vector<1x2x8x128xf32> to vector<2x8x128xf32>
      %60 = vector.shape_cast %57 : vector<2x8x128xf32> to vector<1x2x8x128xf32>
      tpu.vector_store %arg6[%c0_47, %c0_48, %c0_49, %c0_50], %60 {strides = array<i32>} : memref<1x2x8x128xf32, #tpu.memory_space<vmem>>, vector<1x2x8x128xf32>,
    } else {
    }
    %c0 = arith.constant 0 : index
    %c0_1 = arith.constant 0 : index
    %c0_2 = arith.constant 0 : index
    %3 = vector.load %arg2[%c0, %c0_1, %c0_2] : memref<2x8x128xf32, #tpu.memory_space<vmem>>, vector<2x8x128xf32>
    %c0_3 = arith.constant 0 : index
    %c0_4 = arith.constant 0 : index
    %c0_5 = arith.constant 0 : index
    %4 = vector.load %arg3[%c0_3, %c0_4, %c0_5] : memref<2x8x128xf32, #tpu.memory_space<vmem>>, vector<2x8x128xf32>
    %5 = math.absf %3 : vector<2x8x128xf32>
    %cst = arith.constant 0.000000e+00 : f32
    %6 = vector.broadcast %cst : f32 to vector<2x8x128xf32>
    %7 = arith.subf %6, %5 : vector<2x8x128xf32>
    %8 = math.exp %7 : vector<2x8x128xf32>
    %cst_6 = arith.constant 0.000000e+00 : f32
    %9 = vector.broadcast %cst_6 : f32 to vector<2x8x128xf32>
    %10 = arith.maximumf %3, %9 : vector<2x8x128xf32>
    %11 = math.log1p %8 : vector<2x8x128xf32>
    %12 = arith.addf %10, %11 : vector<2x8x128xf32>
    %cst_7 = arith.constant 1.000000e+02 : f32
    %13 = vector.broadcast %cst_7 : f32 to vector<2x8x128xf32>
    %14 = arith.mulf %13, %4 : vector<2x8x128xf32>
    %15 = arith.subf %12, %3 : vector<2x8x128xf32>
    %16 = arith.mulf %14, %15 : vector<2x8x128xf32>
    %cst_8 = arith.constant 1.000000e+00 : f32
    %17 = vector.broadcast %cst_8 : f32 to vector<2x8x128xf32>
    %18 = arith.subf %17, %4 : vector<2x8x128xf32>
    %19 = arith.mulf %18, %12 : vector<2x8x128xf32>
    %20 = arith.addf %16, %19 : vector<2x8x128xf32>
    %cst_9 = arith.constant 1.000000e+00 : f32
    %21 = vector.broadcast %cst_9 : f32 to vector<2x8x128xf32>
    %22 = arith.addf %21, %8 : vector<2x8x128xf32>
    %cst_10 = arith.constant 1.000000e+00 : f32
    %23 = vector.broadcast %cst_10 : f32 to vector<2x8x128xf32>
    %24 = arith.divf %23, %22 : vector<2x8x128xf32>
    %cst_11 = arith.constant 0.000000e+00 : f32
    %25 = vector.broadcast %cst_11 : f32 to vector<2x8x128xf32>
    %26 = arith.cmpf oge, %3, %25 : vector<2x8x128xf32>
    %27 = arith.mulf %8, %24 : vector<2x8x128xf32>
    %28 = arith.select %26, %24, %27 : vector<2x8x128xi1>, vector<2x8x128xf32>
    %c0_12 = arith.constant 0 : index
    %c0_13 = arith.constant 0 : index
    %c0_14 = arith.constant 0 : index
    %c0_15 = arith.constant 0 : index
    %29 = vector.load %arg4[%c0_12, %c0_13, %c0_14, %c0_15] : memref<1x2x8x128xf32, #tpu.memory_space<vmem>>, vector<1x2x8x128xf32>
    %30 = vector.shape_cast %29 : vector<1x2x8x128xf32> to vector<2x8x128xf32>
    %31 = arith.addf %30, %20 : vector<2x8x128xf32>
    %c0_16 = arith.constant 0 : index
    %c0_17 = arith.constant 0 : index
    %c0_18 = arith.constant 0 : index
    %c0_19 = arith.constant 0 : index
    %32 = vector.load %arg4[%c0_16, %c0_17, %c0_18, %c0_19] : memref<1x2x8x128xf32, #tpu.memory_space<vmem>>, vector<1x2x8x128xf32>
    %33 = vector.shape_cast %32 : vector<1x2x8x128xf32> to vector<2x8x128xf32>
    %34 = vector.shape_cast %31 : vector<2x8x128xf32> to vector<1x2x8x128xf32>
    tpu.vector_store %arg4[%c0_16, %c0_17, %c0_18, %c0_19], %34 {strides = array<i32>} : memref<1x2x8x128xf32, #tpu.memory_space<vmem>>, vector<1x2x8x128xf32>,
    %c0_20 = arith.constant 0 : index
    %c0_21 = arith.constant 0 : index
    %c0_22 = arith.constant 0 : index
    %c0_23 = arith.constant 0 : index
    %35 = vector.load %arg5[%c0_20, %c0_21, %c0_22, %c0_23] : memref<1x2x8x128xf32, #tpu.memory_space<vmem>>, vector<1x2x8x128xf32>
    %36 = vector.shape_cast %35 : vector<1x2x8x128xf32> to vector<2x8x128xf32>
    %37 = arith.mulf %28, %4 : vector<2x8x128xf32>
    %38 = arith.addf %36, %37 : vector<2x8x128xf32>
    %c0_24 = arith.constant 0 : index
    %c0_25 = arith.constant 0 : index
    %c0_26 = arith.constant 0 : index
    %c0_27 = arith.constant 0 : index
    %39 = vector.load %arg5[%c0_24, %c0_25, %c0_26, %c0_27] : memref<1x2x8x128xf32, #tpu.memory_space<vmem>>, vector<1x2x8x128xf32>
    %40 = vector.shape_cast %39 : vector<1x2x8x128xf32> to vector<2x8x128xf32>
    %41 = vector.shape_cast %38 : vector<2x8x128xf32> to vector<1x2x8x128xf32>
    tpu.vector_store %arg5[%c0_24, %c0_25, %c0_26, %c0_27], %41 {strides = array<i32>} : memref<1x2x8x128xf32, #tpu.memory_space<vmem>>, vector<1x2x8x128xf32>,
    %c0_28 = arith.constant 0 : index
    %c0_29 = arith.constant 0 : index
    %c0_30 = arith.constant 0 : index
    %c0_31 = arith.constant 0 : index
    %42 = vector.load %arg6[%c0_28, %c0_29, %c0_30, %c0_31] : memref<1x2x8x128xf32, #tpu.memory_space<vmem>>, vector<1x2x8x128xf32>
    %43 = vector.shape_cast %42 : vector<1x2x8x128xf32> to vector<2x8x128xf32>
    %44 = arith.addf %28, %4 : vector<2x8x128xf32>
    %45 = arith.addf %43, %44 : vector<2x8x128xf32>
    %c0_32 = arith.constant 0 : index
    %c0_33 = arith.constant 0 : index
    %c0_34 = arith.constant 0 : index
    %c0_35 = arith.constant 0 : index
    %46 = vector.load %arg6[%c0_32, %c0_33, %c0_34, %c0_35] : memref<1x2x8x128xf32, #tpu.memory_space<vmem>>, vector<1x2x8x128xf32>
    %47 = vector.shape_cast %46 : vector<1x2x8x128xf32> to vector<2x8x128xf32>
    %48 = vector.shape_cast %45 : vector<2x8x128xf32> to vector<1x2x8x128xf32>
    tpu.vector_store %arg6[%c0_32, %c0_33, %c0_34, %c0_35], %48 {strides = array<i32>} : memref<1x2x8x128xf32, #tpu.memory_space<vmem>>, vector<1x2x8x128xf32>,
    return
  }
  func.func @transform_0(%arg0: i32, %arg1: i32) -> (i32, i32, i32) {
    %c1_i32 = arith.constant 1 : i32
    %0 = arith.muli %arg0, %c1_i32 : i32
    %1 = arith.addi %0, %arg1 : i32
    %c0_i32 = arith.constant 0 : i32
    %c0_i32_0 = arith.constant 0 : i32
    %c0_i32_1 = arith.constant 0 : i32
    return %c0_i32, %1, %c0_i32_0 : i32, i32, i32
  }
  func.func @transform_1(%arg0: i32, %arg1: i32) -> (i32, i32, i32) {
    %c1_i32 = arith.constant 1 : i32
    %0 = arith.muli %arg0, %c1_i32 : i32
    %1 = arith.addi %0, %arg1 : i32
    %c0_i32 = arith.constant 0 : i32
    %c0_i32_0 = arith.constant 0 : i32
    %c0_i32_1 = arith.constant 0 : i32
    return %c0_i32, %1, %c0_i32_0 : i32, i32, i32
  }
  func.func @transform_2(%arg0: i32, %arg1: i32) -> (i32, i32, i32, i32) {
    %c0_i32 = arith.constant 0 : i32
    %c0_i32_0 = arith.constant 0 : i32
    %c0_i32_1 = arith.constant 0 : i32
    %c0_i32_2 = arith.constant 0 : i32
    return %arg0, %c0_i32, %c0_i32_0, %c0_i32_1 : i32, i32, i32, i32
  }
  func.func @transform_3(%arg0: i32, %arg1: i32) -> (i32, i32, i32, i32) {
    %c0_i32 = arith.constant 0 : i32
    %c0_i32_0 = arith.constant 0 : i32
    %c0_i32_1 = arith.constant 0 : i32
    %c0_i32_2 = arith.constant 0 : i32
    return %arg0, %c0_i32, %c0_i32_0, %c0_i32_1 : i32, i32, i32, i32
  }
  func.func @transform_4(%arg0: i32, %arg1: i32) -> (i32, i32, i32, i32) {
    %c0_i32 = arith.constant 0 : i32
    %c0_i32_0 = arith.constant 0 : i32
    %c0_i32_1 = arith.constant 0 : i32
    %c0_i32_2 = arith.constant 0 : i32
    return %arg0, %c0_i32, %c0_i32_0, %c0_i32_1 : i32, i32, i32, i32
  }
}

</mosaic_0001>

<llo_original>
// kernel: tpu_custom_call.1
$region0: #{tpu_custom_call.1}
  #allocation0 [shape = 'u32[]', space=smem, size = 0x4, offset = 0x4, fixed_abs, tag = 'smem constant byte address 0x4 - core index']
  #allocation1 [shape = 'u32[144,128]{1,0:T(1,128)}', space=vmem, size = 0x12000, scoped, tag = 'internal scratch']
  %s0 = inlined_call_operand.hbm [shape: f32[2,16,128], index: 0, kind: input, shape index: {}]
  %s1 = inlined_call_operand.hbm [shape: f32[2,16,128], index: 1, kind: input, shape index: {}]
  %s2 = inlined_call_operand.hbm [shape: f32[2,2,8,128], index: 2, kind: output, shape index: {0}]
  %s3 = inlined_call_operand.hbm [shape: f32[2,2,8,128], index: 3, kind: output, shape index: {1}]
  %s4 = inlined_call_operand.hbm [shape: f32[2,2,8,128], index: 4, kind: output, shape index: {2}]
  %5 = xla_tuple %s2, %s3, %s4
  %s6 = sld [smem:[#allocation0]]
  $region69: #{tpu_custom_call.1} parent=0
    _
  %s8 = ssub.s32 1, %s6
  %s9 = scalar_select 0, %s8, %s6
  $region1: #{tpu_custom_call.1} parent=0
    #allocation2 [shape = 'u8[16384]{0}', space=vmem, size = 0x4000, scoped, tag = 'input window, operand 0']
    #allocation3 [shape = 's32[2]{0}', space=sflag, size = 0x8, scoped, tag = 'scoped memory for tpu_custom_call.1']
    #allocation4 [shape = 's32[2]{0}', space=sflag, size = 0x8, scoped, tag = 'scoped memory for tpu_custom_call.1']
    #allocation5 [shape = 'u8[16384]{0}', space=vmem, size = 0x4000, scoped, tag = 'input window, operand 1']
    #allocation6 [shape = 's32[2]{0}', space=sflag, size = 0x8, scoped, tag = 'scoped memory for tpu_custom_call.1']
    #allocation7 [shape = 'u8[16384]{0}', space=vmem, size = 0x4000, scoped, tag = 'output window, operand 0']
    #allocation8 [shape = 'u8[16384]{0}', space=vmem, size = 0x4000, scoped, tag = 'output window, operand 1']
    #allocation9 [shape = 's32[2]{0}', space=sflag, size = 0x8, scoped, tag = 'scoped memory for tpu_custom_call.1']
    #allocation10 [shape = 'u8[16384]{0}', space=vmem, size = 0x4000, scoped, tag = 'output window, operand 2']
    %10 = vsyncpa [#allocation3], 0
    %s11 = scalar_lea.sflag [#allocation3], 1
    %12 = vsyncpa %s11, 0
    %13 = vsyncpa [#allocation6], 0
    %s14 = scalar_lea.sflag [#allocation6], 1
    %15 = vsyncpa %s14, 0
    %16 = vsyncpa [#allocation4], 0
    %s17 = scalar_lea.sflag [#allocation4], 1
    %18 = vsyncpa %s17, 0
    %19 = vsyncpa [#allocation9], 0
    %s20 = scalar_lea.sflag [#allocation9], 1
    %21 = vsyncpa %s20, 0
    loop: start=0, step=1, limit=4
    $region2: #{tpu_custom_call.1} parent=1 // loop_pre_header
      _
    $region3: #{tpu_custom_call.1} parent=1 // loop_header
      %s23 = sphi 0, %s27
      %p24 = scmp.ge.s32.totalorder %s23, 4
      %s30 = sphi 0, %s42
      %s31 = sphi 0, %s38
      %s32 = sphi 0, %s30
      %s33 = sphi 0, %s31
      %s34 = sphi 0, %s32
      %s35 = sphi 0, %s33
      %s47 = sphi 0, %s49
      %s50 = sphi 0, %s47
      %s51 = sphi 0, %s50
      %s67 = sphi 0, %s51
      %s75 = sphi 0, %s77
      %s78 = sphi 0, %s75
      %s79 = sphi 0, %s78
      %s95 = sphi 0, %s79
      %s101 = sphi 0, %s103
      %s104 = sphi 0, %s101
      %s105 = sphi 0, %s104
      %s121 = sphi 0, %s105
      %s127 = sphi 0, %s129
      %s130 = sphi 0, %s127
      %s131 = sphi 0, %s130
      %s147 = sphi 0, %s131
      %s153 = sphi 0, %s155
      %s156 = sphi 0, %s153
      %s157 = sphi 0, %s156
      %s173 = sphi 0, %s157
    $region4: #{tpu_custom_call.1} parent=1 // loop_header_branch
      %26 = sbr.rel (%p24) target = $region8
    $region5: #{tpu_custom_call.1} parent=1 // loop_body
      %s28 = ssub.s32 %s23, 1
      %s29 = ssub.s32 %s23, 2
      %s36 = sadd.s32 1, %s31
      %p37 = scmp.ge.s32.totalorder %s36, 1
      %s38 = scalar_select %p37, 0, %s36
      %s39 = sadd.s32 1, %s30
      %s40 = scalar_select %p37, %s39, %s30
      %p41 = scmp.ge.s32.totalorder %s40, 2
      %s42 = scalar_select %p41, 0, %s40
      %s43 = sadd.s32 %s30, %s31
      %s44 = sadd.s32 %s42, %s38
      %s45 = ssub.s32 %s43, %s44
      %p46 = scmp.eq.s32.totalorder %s45, 0
      %s48 = sadd.s32 %s47, 1
      %s49 = scalar_select %p46, %s47, %s48
      %p52 = pneg %p46
      %p53 = scmp.eq.s32.totalorder %s23, 1
      %p54 = por %p52, %p53
      %p55 = scmp.ne.s32.totalorder %s47, %s50
      %p56 = scmp.eq.s32.totalorder %s23, 0
      %p57 = por %p55, %p56
      %p58 = scmp.ne.s32.totalorder %s47, %s50
      %p59 = scmp.eq.s32.totalorder %s28, 1
      %p60 = por %p58, %p59
      %p61 = scmp.ne.s32.totalorder %s50, %s51
      %p62 = scmp.eq.s32.totalorder %s28, 0
      %p63 = por %p61, %p62
      %p64 = scmp.ne.s32.totalorder %s50, %s51
      %p65 = scmp.eq.s32.totalorder %s29, 1
      %p66 = por %p64, %p65
      %p68 = scmp.ne.s32.totalorder %s51, %s67
      %p69 = scmp.eq.s32.totalorder %s29, 0
      %p70 = por %p68, %p69
      %s71 = sadd.s32 %s30, %s31
      %s72 = sadd.s32 %s42, %s38
      %s73 = ssub.s32 %s71, %s72
      %p74 = scmp.eq.s32.totalorder %s73, 0
      %s76 = sadd.s32 %s75, 1
      %s77 = scalar_select %p74, %s75, %s76
      %p80 = pneg %p74
      %p81 = scmp.eq.s32.totalorder %s23, 1
      %p82 = por %p80, %p81
      %p83 = scmp.ne.s32.totalorder %s75, %s78
      %p84 = scmp.eq.s32.totalorder %s23, 0
      %p85 = por %p83, %p84
      %p86 = scmp.ne.s32.totalorder %s75, %s78
      %p87 = scmp.eq.s32.totalorder %s28, 1
      %p88 = por %p86, %p87
      %p89 = scmp.ne.s32.totalorder %s78, %s79
      %p90 = scmp.eq.s32.totalorder %s28, 0
      %p91 = por %p89, %p90
      %p92 = scmp.ne.s32.totalorder %s78, %s79
      %p93 = scmp.eq.s32.totalorder %s29, 1
      %p94 = por %p92, %p93
      %p96 = scmp.ne.s32.totalorder %s79, %s95
      %p97 = scmp.eq.s32.totalorder %s29, 0
      %p98 = por %p96, %p97
      %s99 = ssub.s32 %s30, %s42
      %p100 = scmp.eq.s32.totalorder %s99, 0
      %s102 = sadd.s32 %s101, 1
      %s103 = scalar_select %p100, %s101, %s102
      %p106 = pneg %p100
      %p107 = scmp.eq.s32.totalorder %s23, 1
      %p108 = por %p106, %p107
      %p109 = scmp.ne.s32.totalorder %s101, %s104
      %p110 = scmp.eq.s32.totalorder %s23, 0
      %p111 = por %p109, %p110
      %p112 = scmp.ne.s32.totalorder %s101, %s104
      %p113 = scmp.eq.s32.totalorder %s28, 1
      %p114 = por %p112, %p113
      %p115 = scmp.ne.s32.totalorder %s104, %s105
      %p116 = scmp.eq.s32.totalorder %s28, 0
      %p117 = por %p115, %p116
      %p118 = scmp.ne.s32.totalorder %s104, %s105
      %p119 = scmp.eq.s32.totalorder %s29, 1
      %p120 = por %p118, %p119
      %p122 = scmp.ne.s32.totalorder %s105, %s121
      %p123 = scmp.eq.s32.totalorder %s29, 0
      %p124 = por %p122, %p123
      %s125 = ssub.s32 %s30, %s42
      %p126 = scmp.eq.s32.totalorder %s125, 0
      %s128 = sadd.s32 %s127, 1
      %s129 = scalar_select %p126, %s127, %s128
      %p132 = pneg %p126
      %p133 = scmp.eq.s32.totalorder %s23, 1
      %p134 = por %p132, %p133
      %p135 = scmp.ne.s32.totalorder %s127, %s130
      %p136 = scmp.eq.s32.totalorder %s23, 0
      %p137 = por %p135, %p136
      %p138 = scmp.ne.s32.totalorder %s127, %s130
      %p139 = scmp.eq.s32.totalorder %s28, 1
      %p140 = por %p138, %p139
      %p141 = scmp.ne.s32.totalorder %s130, %s131
      %p142 = scmp.eq.s32.totalorder %s28, 0
      %p143 = por %p141, %p142
      %p144 = scmp.ne.s32.totalorder %s130, %s131
      %p145 = scmp.eq.s32.totalorder %s29, 1
      %p146 = por %p144, %p145
      %p148 = scmp.ne.s32.totalorder %s131, %s147
      %p149 = scmp.eq.s32.totalorder %s29, 0
      %p150 = por %p148, %p149
      %s151 = ssub.s32 %s30, %s42
      %p152 = scmp.eq.s32.totalorder %s151, 0
      %s154 = sadd.s32 %s153, 1
      %s155 = scalar_select %p152, %s153, %s154
      %p158 = pneg %p152
      %p159 = scmp.eq.s32.totalorder %s23, 1
      %p160 = por %p158, %p159
      %p161 = scmp.ne.s32.totalorder %s153, %s156
      %p162 = scmp.eq.s32.totalorder %s23, 0
      %p163 = por %p161, %p162
      %p164 = scmp.ne.s32.totalorder %s153, %s156
      %p165 = scmp.eq.s32.totalorder %s28, 1
      %p166 = por %p164, %p165
      %p167 = scmp.ne.s32.totalorder %s156, %s157
      %p168 = scmp.eq.s32.totalorder %s28, 0
      %p169 = por %p167, %p168
      %p170 = scmp.ne.s32.totalorder %s156, %s157
      %p171 = scmp.eq.s32.totalorder %s29, 1
      %p172 = por %p170, %p171
      %p174 = scmp.ne.s32.totalorder %s157, %s173
      %p175 = scmp.eq.s32.totalorder %s29, 0
      %p176 = por %p174, %p175
      %p177 = scmp.le.s32.totalorder 1, %s23
      %p178 = scmp.lt.s32.totalorder %s23, 3
      %p179 = pnand %p177, %p178
      %p180 = pneg %p179
      // Predicated region
      $region9: #{tpu_custom_call.1} parent=5 // pred_check
        _
      $region10: #{tpu_custom_call.1} parent=5 // pred_check_branch
        %182 = sbr.rel (%p179) target = $region12
      $region11: #{tpu_custom_call.1} parent=5 // pred_region
        %s183 = ssub.s32 %s23, 1
      $region12: #{tpu_custom_call.1} parent=5 // pred_fallthru
        _
      %p184 = scmp.lt.s32.totalorder %s23, 2
      // Predicated region
      $region13: #{tpu_custom_call.1} parent=5 // pred_check
        %p185 = pneg %p184
      $region14: #{tpu_custom_call.1} parent=5 // pred_check_branch
        %187 = sbr.rel (%p185) target = $region16
      $region15: #{tpu_custom_call.1} parent=5 // pred_region
        // Predicated region
        $region17: #{tpu_custom_call.1} parent=15 // pred_check
          %p188 = pneg %p57
        $region18: #{tpu_custom_call.1} parent=15 // pred_check_branch
          %190 = sbr.rel (%p188) target = $region20
        $region19: #{tpu_custom_call.1} parent=15 // pred_region
          %s191 = sand.u32 %s47, 1
          %s192 = scalar_lea.sflag [#allocation3], %s191
          %s193 = sand.u32 %s47, 1
          %s194 = smul.addr %s193, 16
          %s195 = scalar_lea.vmem [#allocation2], %s194
          %s196 = sadd.s32 %s30, %s31
          %s198 = ssub.s32 256, 256
          %199 = vsyncadd %s192, %s198
          %s200 = smul.addr %s196, 128
          %s201 = scalar_lea.hbm %s0, %s200
          %s202 = sshll.u32 %s195, 4
          %s203 = int_to_ptr.vmem [resolvable:$true] %s202
          %208 = dma.hbm_to_vmem [thread:$0]  %s201, 256, %s203, %s192, 256, 128, 8
        $region20: #{tpu_custom_call.1} parent=15 // pred_fallthru
          _
        // Predicated region
        $region21: #{tpu_custom_call.1} parent=15 // pred_check
          %p209 = pneg %p85
        $region22: #{tpu_custom_call.1} parent=15 // pred_check_branch
          %211 = sbr.rel (%p209) target = $region24
        $region23: #{tpu_custom_call.1} parent=15 // pred_region
          %s212 = sand.u32 %s75, 1
          %s213 = scalar_lea.sflag [#allocation6], %s212
          %s214 = sand.u32 %s75, 1
          %s215 = smul.addr %s214, 16
          %s216 = scalar_lea.vmem [#allocation5], %s215
          %s217 = sadd.s32 %s30, %s31
          %s219 = ssub.s32 256, 256
          %220 = vsyncadd %s213, %s219
          %s221 = smul.addr %s217, 128
          %s222 = scalar_lea.hbm %s1, %s221
          %s223 = sshll.u32 %s216, 4
          %s224 = int_to_ptr.vmem [resolvable:$true] %s223
          %229 = dma.hbm_to_vmem [thread:$0]  %s222, 256, %s224, %s213, 256, 128, 8
        $region24: #{tpu_custom_call.1} parent=15 // pred_fallthru
          _
      $region16: #{tpu_custom_call.1} parent=5 // pred_fallthru
        _
      %p230 = scmp.le.s32.totalorder 1, %s23
      %p231 = scmp.lt.s32.totalorder %s23, 3
      %p232 = pnand %p230, %p231
      %p233 = pneg %p232
      // Predicated region
      $region25: #{tpu_custom_call.1} parent=5 // pred_check
        _
      $region26: #{tpu_custom_call.1} parent=5 // pred_check_branch
        %235 = sbr.rel (%p232) target = $region28
      $region27: #{tpu_custom_call.1} parent=5 // pred_region
        %s236 = ssub.s32 %s23, 1
        %s237 = sand.u32 %s50, 1
        %s238 = scalar_lea.sflag [#allocation3], %s237
        %s239 = sand.u32 %s50, 1
        %s240 = smul.addr %s239, 16
        %s241 = scalar_lea.vmem [#allocation2], %s240
        // Predicated region
        $region29: #{tpu_custom_call.1} parent=27 // pred_check
          %p242 = pneg %p63
        $region30: #{tpu_custom_call.1} parent=27 // pred_check_branch
          %244 = sbr.rel (%p242) target = $region32
        $region31: #{tpu_custom_call.1} parent=27 // pred_region
          %245 = dma.done %s238, 256
        $region32: #{tpu_custom_call.1} parent=27 // pred_fallthru
          _
        %s246 = sand.u32 %s78, 1
        %s247 = scalar_lea.sflag [#allocation6], %s246
        %s248 = sand.u32 %s78, 1
        %s249 = smul.addr %s248, 16
        %s250 = scalar_lea.vmem [#allocation5], %s249
        // Predicated region
        $region33: #{tpu_custom_call.1} parent=27 // pred_check
          %p251 = pneg %p91
        $region34: #{tpu_custom_call.1} parent=27 // pred_check_branch
          %253 = sbr.rel (%p251) target = $region36
        $region35: #{tpu_custom_call.1} parent=27 // pred_region
          %254 = dma.done %s247, 256
        $region36: #{tpu_custom_call.1} parent=27 // pred_fallthru
          _
        %s255 = sand.u32 %s50, 1
        %s256 = scalar_lea.sflag [#allocation3], %s255
        %s257 = sand.u32 %s50, 1
        %s258 = smul.addr %s257, 16
        %s259 = scalar_lea.vmem [#allocation2], %s258
        %p260 = pneg %p63
        %p261 = pneg %p60
        %s262 = sand.u32 %s78, 1
        %s263 = scalar_lea.sflag [#allocation6], %s262
        %s264 = sand.u32 %s78, 1
        %s265 = smul.addr %s264, 16
        %s266 = scalar_lea.vmem [#allocation5], %s265
        %p267 = pneg %p91
        %p268 = pneg %p88
        %p269 = pneg %p117
        %p270 = pneg %p114
        %s271 = sand.u32 %s104, 1
        %s272 = scalar_lea.sflag [#allocation4], %s271
        %s273 = sand.u32 %s104, 1
        %s274 = smul.addr %s273, 16
        %s275 = scalar_lea.vmem [#allocation7], %s274
        %p276 = pneg %p143
        %p277 = pneg %p140
        %s278 = sand.u32 %s28, 1
        %s279 = scalar_lea.sflag [#allocation9], %s278
        %s280 = sand.u32 %s130, 1
        %s281 = smul.addr %s280, 16
        %s282 = scalar_lea.vmem [#allocation8], %s281
        %p283 = pneg %p169
        %p284 = pneg %p166
        %s285 = sand.u32 %s28, 1
        %s286 = scalar_lea.sflag [#allocation9], %s285
        %s287 = sand.u32 %s156, 1
        %s288 = smul.addr %s287, 16
        %s289 = scalar_lea.vmem [#allocation10], %s288
        %s290 = sadd.s32 %s32, %s33
        %s291 = sadd.s32 %s32, %s33
        %p292 = scmp.eq.s32.totalorder %s33, 0
        // Predicated region
        $region37: #{tpu_custom_call.1} parent=27 // pred_check
          %p293 = pneg %p292
        $region38: #{tpu_custom_call.1} parent=27 // pred_check_branch
          %295 = sbr.rel (%p293) target = $region40
        $region39: #{tpu_custom_call.1} parent=27 // pred_region
          %296 = vst [vmem:[%s275] sm:$0xff] 0.0
          %297 = vst [vmem:[%s275 + $0x8] sm:$0xff] 0.0
          %298 = vst [vmem:[%s282] sm:$0xff] 0.0
          %299 = vst [vmem:[%s282 + $0x8] sm:$0xff] 0.0
          %300 = vst [vmem:[%s289] sm:$0xff] 0.0
          %301 = vst [vmem:[%s289 + $0x8] sm:$0xff] 0.0
        $region40: #{tpu_custom_call.1} parent=27 // pred_fallthru
          _
        %v302 = vld [vmem:[%s241] sm:$0xff]
        %v303 = vld [vmem:[%s241 + $0x8] sm:$0xff]
        %v304 = vld [vmem:[%s250] sm:$0xff]
        %v305 = vld [vmem:[%s250 + $0x8] sm:$0xff]
        %v306 = vand.u32 2147483647, %v302
        %v307 = vand.u32 2147483647, %v303
        %v308 = vsub.f32 0.0, %v306
        %v309 = vsub.f32 0.0, %v307
        %v310 = vmul.f32 %v308, 1.442695
        %v311 = vpow.pop %v310
        %v312 = vmul.f32 %v309, 1.442695
        %v313 = vpow.pop %v312
        %v314 = vmax.f32 %v302, 0.0
        %v315 = vmax.f32 %v303, 0.0
        %v316 = vadd.f32 %v311, 1.0
        %v317 = vlog2.pop %v316
        %v318 = vmul.f32 %v317, 0.6931472
        %v319 = vmul.f32 -0.5, %v311
        %v320 = vadd.f32 %v319, 1.0
        %v321 = vmul.f32 %v320, %v311
        %v322 = vand.u32 2147483647, %v311
        %vm323 = vcmp.lt.f32.partialorder %v322, 0.0004427343
        %v324 = vsel %vm323, %v321, %v318
        %v325 = vadd.f32 %v313, 1.0
        %v326 = vlog2.pop %v325
        %v327 = vmul.f32 %v326, 0.6931472
        %v328 = vmul.f32 -0.5, %v313
        %v329 = vadd.f32 %v328, 1.0
        %v330 = vmul.f32 %v329, %v313
        %v331 = vand.u32 2147483647, %v313
        %vm332 = vcmp.lt.f32.partialorder %v331, 0.0004427343
        %v333 = vsel %vm332, %v330, %v327
        %v334 = vadd.f32 %v314, %v324
        %v335 = vadd.f32 %v315, %v333
        %v336 = vmul.f32 %v304, 100.0
        %v337 = vmul.f32 %v305, 100.0
        %v338 = vsub.f32 %v334, %v302
        %v339 = vsub.f32 %v335, %v303
        %v340 = vmul.f32 %v336, %v338
        %v341 = vmul.f32 %v337, %v339
        %v342 = vsub.f32 1.0, %v304
        %v343 = vsub.f32 1.0, %v305
        %v344 = vmul.f32 %v342, %v334
        %v345 = vmul.f32 %v343, %v335
        %v346 = vadd.f32 %v340, %v344
        %v347 = vadd.f32 %v341, %v345
        %v348 = vadd.f32 %v311, 1.0
        %v349 = vadd.f32 %v313, 1.0
        %v350 = vrcp.pop %v348
        %v351 = vmul.f32 1.0, %v350
        %v352 = vrcp.pop %v349
        %v353 = vmul.f32 1.0, %v352
        %vm354 = vcmp.ge.f32.partialorder %v302, 0.0
        %vm355 = vcmp.ge.f32.partialorder %v303, 0.0
        %v356 = vmul.f32 %v311, %v351
        %v357 = vmul.f32 %v313, %v353
        %v358 = vsel %vm354, %v351, %v356
        %v359 = vsel %vm355, %v353, %v357
        %v360 = vld [vmem:[%s275] sm:$0xff]
        %v361 = vld [vmem:[%s275 + $0x8] sm:$0xff]
        %v362 = vadd.f32 %v360, %v346
        %v363 = vadd.f32 %v361, %v347
        %364 = vst [vmem:[%s275] sm:$0xff] %v362
        %365 = vst [vmem:[%s275 + $0x8] sm:$0xff] %v363
        %v366 = vld [vmem:[%s282] sm:$0xff]
        %v367 = vld [vmem:[%s282 + $0x8] sm:$0xff]
        %v368 = vmul.f32 %v358, %v304
        %v369 = vmul.f32 %v359, %v305
        %v370 = vadd.f32 %v366, %v368
        %v371 = vadd.f32 %v367, %v369
        %372 = vst [vmem:[%s282] sm:$0xff] %v370
        %373 = vst [vmem:[%s282 + $0x8] sm:$0xff] %v371
        %v374 = vld [vmem:[%s289] sm:$0xff]
        %v375 = vld [vmem:[%s289 + $0x8] sm:$0xff]
        %v376 = vadd.f32 %v358, %v304
        %v377 = vadd.f32 %v359, %v305
        %v378 = vadd.f32 %v374, %v376
        %v379 = vadd.f32 %v375, %v377
        %380 = vst [vmem:[%s289] sm:$0xff] %v378
        %381 = vst [vmem:[%s289 + $0x8] sm:$0xff] %v379
        %s382 = sand.u32 %s104, 1
        %s383 = scalar_lea.sflag [#allocation4], %s382
        %s384 = sand.u32 %s104, 1
        %s385 = smul.addr %s384, 16
        %s386 = scalar_lea.vmem [#allocation7], %s385
        %s387 = sand.u32 %s28, 1
        %s388 = scalar_lea.sflag [#allocation9], %s387
        %s389 = sand.u32 %s130, 1
        %s390 = smul.addr %s389, 16
        %s391 = scalar_lea.vmem [#allocation8], %s390
        %s392 = sand.u32 %s28, 1
        %s393 = scalar_lea.sflag [#allocation9], %s392
        %s394 = sand.u32 %s156, 1
        %s395 = smul.addr %s394, 16
        %s396 = scalar_lea.vmem [#allocation10], %s395
        // Predicated region
        $region41: #{tpu_custom_call.1} parent=27 // pred_check
          %p397 = pneg %p114
        $region42: #{tpu_custom_call.1} parent=27 // pred_check_branch
          %399 = sbr.rel (%p397) target = $region44
        $region43: #{tpu_custom_call.1} parent=27 // pred_region
          %s401 = ssub.s32 256, 256
          %402 = vsyncadd %s383, %s401
          %s403 = smul.addr %s32, 2
          %s404 = smul.addr %s403, 128
          %s405 = scalar_lea.hbm %s2, %s404
          %s406 = sshll.u32 %s386, 4
          %s407 = int_to_ptr.vmem [resolvable:$true] %s406
          %412 = dma.vmem_to_hbm [thread:$0]  %s407, 256, %s405, %s383, 128, 128, 8
        $region44: #{tpu_custom_call.1} parent=27 // pred_fallthru
          _
        // Predicated region
        $region45: #{tpu_custom_call.1} parent=27 // pred_check
          %p413 = pneg %p140
        $region46: #{tpu_custom_call.1} parent=27 // pred_check_branch
          %415 = sbr.rel (%p413) target = $region48
        $region47: #{tpu_custom_call.1} parent=27 // pred_region
          %s417 = ssub.s32 256, 256
          %418 = vsyncadd %s388, %s417
          %s419 = smul.addr %s32, 2
          %s420 = smul.addr %s419, 128
          %s421 = scalar_lea.hbm %s3, %s420
          %s422 = sshll.u32 %s391, 4
          %s423 = int_to_ptr.vmem [resolvable:$true] %s422
          %428 = dma.vmem_to_hbm [thread:$0]  %s423, 256, %s421, %s388, 128, 128, 8
        $region48: #{tpu_custom_call.1} parent=27 // pred_fallthru
          _
        // Predicated region
        $region49: #{tpu_custom_call.1} parent=27 // pred_check
          %p429 = pneg %p166
        $region50: #{tpu_custom_call.1} parent=27 // pred_check_branch
          %431 = sbr.rel (%p429) target = $region52
        $region51: #{tpu_custom_call.1} parent=27 // pred_region
          %s433 = ssub.s32 256, 256
          %434 = vsyncadd %s393, %s433
          %s435 = smul.addr %s32, 2
          %s436 = smul.addr %s435, 128
          %s437 = scalar_lea.hbm %s4, %s436
          %s438 = sshll.u32 %s396, 4
          %s439 = int_to_ptr.vmem [resolvable:$true] %s438
          %444 = dma.vmem_to_hbm [thread:$0]  %s439, 256, %s437, %s393, 128, 128, 8
        $region52: #{tpu_custom_call.1} parent=27 // pred_fallthru
          _
      $region28: #{tpu_custom_call.1} parent=5 // pred_fallthru
        _
      %p445 = scmp.le.s32.totalorder 2, %s23
      // Predicated region
      $region53: #{tpu_custom_call.1} parent=5 // pred_check
        %p446 = pneg %p445
      $region54: #{tpu_custom_call.1} parent=5 // pred_check_branch
        %448 = sbr.rel (%p446) target = $region56
      $region55: #{tpu_custom_call.1} parent=5 // pred_region
        %s449 = ssub.s32 %s23, 2
        // Predicated region
        $region57: #{tpu_custom_call.1} parent=55 // pred_check
          %p450 = pneg %p120
        $region58: #{tpu_custom_call.1} parent=55 // pred_check_branch
          %452 = sbr.rel (%p450) target = $region60
        $region59: #{tpu_custom_call.1} parent=55 // pred_region
          %s453 = sand.u32 %s105, 1
          %s454 = scalar_lea.sflag [#allocation4], %s453
          %s455 = sand.u32 %s105, 1
          %s456 = smul.addr %s455, 16
          %s457 = scalar_lea.vmem [#allocation7], %s456
          %458 = dma.done %s454, 256
        $region60: #{tpu_custom_call.1} parent=55 // pred_fallthru
          _
        // Predicated region
        $region61: #{tpu_custom_call.1} parent=55 // pred_check
          %p459 = pneg %p146
        $region62: #{tpu_custom_call.1} parent=55 // pred_check_branch
          %461 = sbr.rel (%p459) target = $region64
        $region63: #{tpu_custom_call.1} parent=55 // pred_region
          %s462 = sand.u32 %s29, 1
          %s463 = scalar_lea.sflag [#allocation9], %s462
          %s464 = sand.u32 %s131, 1
          %s465 = smul.addr %s464, 16
          %s466 = scalar_lea.vmem [#allocation8], %s465
          %467 = dma.done %s463, 256
        $region64: #{tpu_custom_call.1} parent=55 // pred_fallthru
          _
        // Predicated region
        $region65: #{tpu_custom_call.1} parent=55 // pred_check
          %p468 = pneg %p172
        $region66: #{tpu_custom_call.1} parent=55 // pred_check_branch
          %470 = sbr.rel (%p468) target = $region68
        $region67: #{tpu_custom_call.1} parent=55 // pred_region
          %s471 = sand.u32 %s29, 1
          %s472 = scalar_lea.sflag [#allocation9], %s471
          %s473 = sand.u32 %s157, 1
          %s474 = smul.addr %s473, 16
          %s475 = scalar_lea.vmem [#allocation10], %s474
          %476 = dma.done %s472, 256
        $region68: #{tpu_custom_call.1} parent=55 // pred_fallthru
          _
      $region56: #{tpu_custom_call.1} parent=5 // pred_fallthru
        _
    $region6: #{tpu_custom_call.1} parent=1 // loop_footer
      %s27 = sadd.s32 1, %s23
    $region7: #{tpu_custom_call.1} parent=1 // loop_footer_branch
      %22 = sbr.rel target = $region3
    $region8: #{tpu_custom_call.1} parent=1 // loop_exit
      _
    %477 = vsyncpa [#allocation3], 1
    %s478 = scalar_lea.sflag [#allocation3], 1
    %479 = vsyncpa %s478, 1
    %480 = vsyncpa [#allocation6], 1
    %s481 = scalar_lea.sflag [#allocation6], 1
    %482 = vsyncpa %s481, 1
    %483 = vsyncpa [#allocation4], 1
    %s484 = scalar_lea.sflag [#allocation4], 1
    %485 = vsyncpa %s484, 1
    %486 = vsyncpa [#allocation9], 1
    %s487 = scalar_lea.sflag [#allocation9], 1
    %488 = vsyncpa %s487, 1

</llo_original>
